<compile_context>
chip_gen: v7x
topology: tpu7x:2x2x1
jax: 0.10.0
libtpu: 0.0.40
codegen_flags: <defaults>
</compile_context>

<pallas_src>
import math
import numpy as np
import jax
import jax.numpy as jnp
from jax.experimental import pallas as pl
from jax.experimental.pallas import tpu as pltpu


# ----------------------------------------------------------------------------
# Geometric algebra setup (Cayley / geometric-product tensor), plain numpy/JAX.
# ----------------------------------------------------------------------------
def build_cayley(metric):
    """Cayley tensor C[i,j,k]: coefficient of blade k in blade_i * blade_j."""
    n = len(metric)
    num_blades = 1 << n
    bitmasks = sorted(range(num_blades), key=lambda b: (bin(b).count("1"), b))
    bm_to_idx = {bm: i for i, bm in enumerate(bitmasks)}
    cayley = np.zeros((num_blades, num_blades, num_blades), dtype=np.float32)
    for a_bm in range(num_blades):
        for b_bm in range(num_blades):
            a = a_bm >> 1
            swaps = 0
            while a:
                swaps += bin(a & b_bm).count("1")
                a >>= 1
            sign = -1.0 if (swaps & 1) else 1.0
            common = a_bm & b_bm
            for i in range(n):
                if common & (1 << i):
                    sign *= metric[i]
            out_bm = a_bm ^ b_bm
            cayley[bm_to_idx[a_bm], bm_to_idx[b_bm], bm_to_idx[out_bm]] += sign
    return jnp.asarray(cayley), num_blades


def from_tensor(values, blade_indices, num_blades):
    """Embed values [..., len(blade_indices)] into full multivectors [..., num_blades]."""
    out = jnp.zeros(values.shape[:-1] + (num_blades,), dtype=values.dtype)
    return out.at[..., blade_indices].set(values)


def _round_up(x, m):
    return ((x + m - 1) // m) * m


def _num_tensorcores():
    """Best-effort TensorCore count per device. v7x / megacore chips expose 2.

    Conservative default of 1 (single grid step) is also correct/efficient on
    multi-TC chips for small problems, so any mis-detection is harmless.
    """
    try:
        kind = jax.devices()[0].device_kind.lower()
    except Exception:
        return 1
    if ("v7" in kind) or ("v4" in kind) or ("v5p" in kind):
        return 2
    return 1


# ----------------------------------------------------------------------------
# Pallas kernel: fused matmul + bias + ReLU over the lane-folded layout.
# ----------------------------------------------------------------------------
def gp_dense_kernel(x_ref, w_ref, b_ref, o_ref):
    # x_ref: (TN, LF*UB)  w_ref: (LF*UB, LF*OB)  b_ref: (1, LF*OB)  o_ref: (TN, LF*OB)
    acc = jnp.dot(x_ref[...], w_ref[...], preferred_element_type=jnp.float32)
    acc = acc + b_ref[...]                                   # f32 epilogue (v5e-safe)
    o_ref[...] = jnp.maximum(acc, 0.0).astype(o_ref.dtype)   # activation='relu'


# ----------------------------------------------------------------------------
# One-time parameter plumbing (per parameter update, NOT per forward call).
# ----------------------------------------------------------------------------
def prepare_gp_dense_params(kernel, bias, blade_indices, cayley, *, compute_dtype=None):
    """Fold the Cayley tensor into the kernel, embed the bias, and lane-fold both.

    Lane folding: OB = O*B is below 128 lanes, so LF = 128/gcd(OB,128) batch rows
    are folded into the lane dimension and the weight is expanded to a block-diagonal
    (LF*UB, LF*OB) matrix. All kernel loads/stores become full 128-lane width
    (no masked vst) — the key lever for this store/bandwidth-bound shape.
    """
    B = cayley.shape[0]
    O, U, _K = kernel.shape
    w_geom = from_tensor(kernel, blade_indices, B)                 # [O, U, B]
    b_geom = from_tensor(bias, blade_indices, B)                   # [O, B]
    # WC[u,i,o,k] = sum_j w_geom[o,u,j] * C[i,j,k]   (parameter glue, no input data)
    wc_flat = jnp.einsum("ouj,ijk->uiok", w_geom, cayley).reshape(U * B, O * B)
    UB, OB = U * B, O * B
    LF = 128 // math.gcd(OB, 128)                                  # lane fold factor
    # Block-diagonal fold of the weight (precomputed once, not per forward).
    # TODO(synk): for large algebras / unit counts where LF^2 blows this up toward
    # VMEM capacity (v7x: 64 MiB), drop the kron and tile the output-unit axis so
    # the per-tile output width is natively a multiple of 128 lanes instead.
    w_bd = jnp.kron(jnp.eye(LF, dtype=wc_flat.dtype), wc_flat)     # (LF*UB, LF*OB)
    if compute_dtype is not None:
        w_bd = w_bd.astype(compute_dtype)
    b_fold = jnp.tile(b_geom.reshape(1, OB).astype(jnp.float32), (1, LF))  # (1, LF*OB)
    w_bd = jax.block_until_ready(w_bd)
    b_fold = jax.block_until_ready(b_fold)
    return {"w_bd": w_bd, "b_fold": b_fold, "LF": LF,
            "U": U, "O": O, "B": B, "UB": UB, "OB": OB,
            "compute_dtype": compute_dtype}


# ----------------------------------------------------------------------------
# Forward pass.
# ----------------------------------------------------------------------------
def geometric_product_dense(x, params, *, tile_rows=512, out_dtype=None):
    """relu( geometric-product dense(x) + bias ): [N, U, B] -> [N, O, B]."""
    N, U, B = x.shape
    assert U == params["U"] and B == params["B"]
    LF, O, UB, OB = params["LF"], params["O"], params["UB"], params["OB"]
    w_bd, b_fold = params["w_bd"], params["b_fold"]
    compute_dtype = params["compute_dtype"]
    out_dtype = out_dtype if out_dtype is not None else x.dtype

    K_dim = LF * UB
    N_dim = LF * OB
    x_itemsize = jnp.dtype(compute_dtype if compute_dtype is not None else x.dtype).itemsize
    out_itemsize = jnp.dtype(out_dtype).itemsize
    w_bytes = w_bd.size * w_bd.dtype.itemsize

    # ---- row tiling: single grid step on 1-TC chips; split only when it pays ----
    rows = pl.cdiv(N, LF)                 # folded row count
    rows_r = _round_up(rows, 16)          # 16-sublane granularity (bf16-safe)
    tn = min(tile_rows, rows_r)
    num_tc = _num_tensorcores()
    if (num_tc > 1 and rows_r // tn < 2 and rows_r >= 512
            and (rows_r // 2) * K_dim * x_itemsize >= w_bytes):
        # Give both v7x TensorCores work: each half-tile keeps >=256 folded rows and
        # per-core activation traffic dominates the duplicated resident weight.
        tn = _round_up(rows_r // 2, 16)
    grid = pl.cdiv(rows_r, tn)
    tn = _round_up(pl.cdiv(rows_r, grid), 16)   # balance tiles -> minimal padding
    rows_pad = grid * tn

    # ---- input plumbing: cast BEFORE pad; skip the pad when nothing to pad ----
    x_flat = x.reshape(N, UB)
    if compute_dtype is not None:
        x_flat = x_flat.astype(compute_dtype)
    if rows_pad * LF != N:
        x_flat = jnp.pad(x_flat, ((0, rows_pad * LF - N), (0, 0)))
    x_fold = x_flat.reshape(rows_pad, K_dim)

    # ---- VMEM budget (weight/bias single-buffered, x/out double-buffered) ----
    vmem_bytes = (2 * tn * K_dim * x_itemsize
                  + 1 * K_dim * N_dim * w_bd.dtype.itemsize
                  + 1 * N_dim * 4
                  + 2 * tn * N_dim * out_itemsize)
    vmem_limit = int(min(max(vmem_bytes * 3 // 2 + (8 << 20), 16 << 20), 64 << 20))

    cost = pl.CostEstimate(
        flops=2 * rows_pad * LF * UB * OB,   # useful MACs only (kron zero blocks excluded)
        transcendentals=0,
        bytes_accessed=int(x_fold.size * x_itemsize
                           + w_bytes
                           + b_fold.size * 4
                           + rows_pad * N_dim * out_itemsize),
    )

    def _call(single_buffer_params):
        if single_buffer_params:
            # Constant index_map operands: single-buffer to halve resident VMEM
            # (matters when the block-diagonal weight grows toward the VMEM limit).
            w_spec = pl.BlockSpec((K_dim, N_dim), lambda i: (0, 0),
                                  pipeline_mode=pl.Buffered(1))
            b_spec = pl.BlockSpec((1, N_dim), lambda i: (0, 0),
                                  pipeline_mode=pl.Buffered(1))
        else:
            w_spec = pl.BlockSpec((K_dim, N_dim), lambda i: (0, 0))
            b_spec = pl.BlockSpec((1, N_dim), lambda i: (0, 0))
        out = pl.pallas_call(
            gp_dense_kernel,
            out_shape=jax.ShapeDtypeStruct((rows_pad, N_dim), out_dtype),
            grid_spec=pltpu.PrefetchScalarGridSpec(
                num_scalar_prefetch=0,
                grid=(grid,),
                in_specs=[pl.BlockSpec((tn, K_dim), lambda i: (i, 0)),
                          w_spec,
                          b_spec],
                out_specs=pl.BlockSpec((tn, N_dim), lambda i: (i, 0)),
            ),
            compiler_params=pltpu.CompilerParams(
                dimension_semantics=("parallel",),
                vmem_limit_bytes=vmem_limit),
            cost_estimate=cost,
        )(x_fold, w_bd, b_fold)
        return jax.block_until_ready(out)

    try:
        out_fold = _call(True)
    except Exception:
        # Fallback for Pallas versions where BlockSpec pipeline_mode / Buffered(1)
        # is unavailable; identical semantics, just default double-buffering.
        out_fold = _call(False)

    out = out_fold.reshape(rows_pad * LF, OB)
    if rows_pad * LF != N:
        out = out[:N]
    return out.reshape(N, O, B)


# ----------------------------------------------------------------------------
# Driver
# ----------------------------------------------------------------------------
if __name__ == "__main__":
    # Algebra: 3D Euclidean GA, metric [1,1,1] -> 8 blades.
    metric = [1.0, 1.0, 1.0]
    cayley, B = build_cayley(metric)

    # Module hyper-parameters (small, consistent with the forward pass).
    N = 256                   # batch
    U = 4                     # num_input_units
    O = 4                     # num_output_units
    blade_indices_kernel = jnp.array([0, 1, 2, 3], dtype=jnp.int32)
    K = blade_indices_kernel.shape[0]

    key = jax.random.PRNGKey(0)
    kx, kw = jax.random.split(key)

    # Inputs: full multivectors per input unit, layout [N, U, B] (blades last).
    x = jax.random.normal(kx, (N, U, B), dtype=jnp.float32)

    # Parameters: xavier/glorot-uniform kernel, zero bias (nn.init.zeros_).
    fan_in, fan_out = U * K, O * K
    limit = float(np.sqrt(6.0 / (fan_in + fan_out)))
    kernel = jax.random.uniform(kw, (O, U, K), minval=-limit, maxval=limit,
                                dtype=jnp.float32)
    bias = jnp.zeros((O, K), dtype=jnp.float32)

    # Pure-JAX reference with the original module semantics.
    w_geom = from_tensor(kernel, blade_indices_kernel, B)          # [O, U, B]
    b_geom = from_tensor(bias, blade_indices_kernel, B)            # [O, B]
    ref = jnp.einsum("nui,ouj,ijk->nok", x, w_geom, cayley) + b_geom[None]
    ref = jnp.maximum(ref, 0.0)

    # f32 path (exact check). Parameter plumbing is prepared ONCE, outside the
    # per-call path.
    params_f32 = prepare_gp_dense_params(kernel, bias, blade_indices_kernel, cayley)
    out = geometric_product_dense(x, params_f32)
    out = jax.block_until_ready(out)
    assert out.shape == (N, O, B)
    np.testing.assert_allclose(np.asarray(out), np.asarray(ref),
                               rtol=1e-5, atol=1e-5)

    # bf16 MXU operands + bf16 output (v6e/v7x bandwidth path); f32 accumulation,
    # f32 bias+ReLU epilogue, cast only at the store.
    params_bf16 = prepare_gp_dense_params(kernel, bias, blade_indices_kernel, cayley,
                                          compute_dtype=jnp.bfloat16)
    out_bf16 = geometric_product_dense(x, params_bf16, out_dtype=jnp.bfloat16)
    out_bf16 = jax.block_until_ready(out_bf16)
    np.testing.assert_allclose(np.asarray(out_bf16, dtype=np.float32),
                               np.asarray(ref), rtol=1e-1, atol=1e-1)

    print("KERNEL_OK")
</pallas_src>

<mosaic_0001>
module attributes {stable_mosaic.version = 11 : i64} {
  func.func @gp_dense_kernel(%arg0: i32, %arg1: memref<64x128xf32, #tpu.memory_space<vmem>>, %arg2: memref<128x128xf32, #tpu.memory_space<vmem>>, %arg3: memref<1x128xf32, #tpu.memory_space<vmem>>, %arg4: memref<64x128xf32, #tpu.memory_space<vmem>>) attributes {dimension_semantics = [#tpu.dimension_semantics<parallel>], iteration_bounds = array<i64: 1>, scalar_prefetch = 0 : i64, scratch_operands = 0 : i64, tpu.core_type = #tpu.core_type<tc>, window_params = [{transform_indices = @transform_0, window_bounds = array<i64: 64, 128>}, {pipeline_mode = #tpu.pipeline_mode<synchronous>, transform_indices = @transform_1, window_bounds = array<i64: 128, 128>}, {pipeline_mode = #tpu.pipeline_mode<synchronous>, transform_indices = @transform_2, window_bounds = array<i64: 1, 128>}, {transform_indices = @transform_3, window_bounds = array<i64: 64, 128>}]} {
    %c0 = arith.constant 0 : index
    %c0_0 = arith.constant 0 : index
    %0 = vector.load %arg1[%c0, %c0_0] : memref<64x128xf32, #tpu.memory_space<vmem>>, vector<64x128xf32>
    %c0_1 = arith.constant 0 : index
    %c0_2 = arith.constant 0 : index
    %1 = vector.load %arg2[%c0_1, %c0_2] : memref<128x128xf32, #tpu.memory_space<vmem>>, vector<128x128xf32>
    %cst = arith.constant dense<0.000000e+00> : vector<64x128xf32>
    %2 = tpu.matmul %0, %1, %cst {dimension_numbers = #tpu.dot_dimension_numbers<[1], [0], [0], [1], [0, 0, 1, 1], [], []>} : vector<64x128xf32>, vector<128x128xf32>, vector<64x128xf32> -> vector<64x128xf32>
    %c0_3 = arith.constant 0 : index
    %c0_4 = arith.constant 0 : index
    %3 = vector.load %arg3[%c0_3, %c0_4] : memref<1x128xf32, #tpu.memory_space<vmem>>, vector<1x128xf32>
    %4 = vector.broadcast %3 : vector<1x128xf32> to vector<64x128xf32>
    %5 = arith.addf %2, %4 : vector<64x128xf32>
    %cst_5 = arith.constant 0.000000e+00 : f32
    %6 = vector.broadcast %cst_5 : f32 to vector<64x128xf32>
    %7 = arith.maximumf %5, %6 : vector<64x128xf32>
    %c0_6 = arith.constant 0 : index
    %c0_7 = arith.constant 0 : index
    %8 = vector.load %arg4[%c0_6, %c0_7] : memref<64x128xf32, #tpu.memory_space<vmem>>, vector<64x128xf32>
    tpu.vector_store %arg4[%c0_6, %c0_7], %7 {strides = array<i32>} : memref<64x128xf32, #tpu.memory_space<vmem>>, vector<64x128xf32>,
    return
  }
  func.func @transform_0(%arg0: i32) -> (i32, i32) {
    %c0_i32 = arith.constant 0 : i32
    %c0_i32_0 = arith.constant 0 : i32
    return %arg0, %c0_i32 : i32, i32
  }
  func.func @transform_1(%arg0: i32) -> (i32, i32) {
    %c0_i32 = arith.constant 0 : i32
    %c0_i32_0 = arith.constant 0 : i32
    %c0_i32_1 = arith.constant 0 : i32
    return %c0_i32, %c0_i32_0 : i32, i32
  }
  func.func @transform_2(%arg0: i32) -> (i32, i32) {
    %c0_i32 = arith.constant 0 : i32
    %c0_i32_0 = arith.constant 0 : i32
    %c0_i32_1 = arith.constant 0 : i32
    return %c0_i32, %c0_i32_0 : i32, i32
  }
  func.func @transform_3(%arg0: i32) -> (i32, i32) {
    %c0_i32 = arith.constant 0 : i32
    %c0_i32_0 = arith.constant 0 : i32
    return %arg0, %c0_i32 : i32, i32
  }
}

module attributes {stable_mosaic.version = 11 : i64} {
  func.func @gp_dense_kernel(%arg0: i32, %arg1: memref<64x128xf32, #tpu.memory_space<vmem>>, %arg2: memref<128x128xf32, #tpu.memory_space<vmem>>, %arg3: memref<1x128xf32, #tpu.memory_space<vmem>>, %arg4: memref<64x128xf32, #tpu.memory_space<vmem>>) attributes {dimension_semantics = [#tpu.dimension_semantics<parallel>], iteration_bounds = array<i64: 1>, scalar_prefetch = 0 : i64, scratch_operands = 0 : i64, tpu.core_type = #tpu.core_type<tc>, window_params = [{transform_indices = @transform_0, window_bounds = array<i64: 64, 128>}, {pipeline_mode = #tpu.pipeline_mode<synchronous>, transform_indices = @transform_1, window_bounds = array<i64: 128, 128>}, {pipeline_mode = #tpu.pipeline_mode<synchronous>, transform_indices = @transform_2, window_bounds = array<i64: 1, 128>}, {transform_indices = @transform_3, window_bounds = array<i64: 64, 128>}]} {
    %c0 = arith.constant 0 : index
    %c0_0 = arith.constant 0 : index
    %0 = vector.load %arg1[%c0, %c0_0] : memref<64x128xf32, #tpu.memory_space<vmem>>, vector<64x128xf32>
    %c0_1 = arith.constant 0 : index
    %c0_2 = arith.constant 0 : index
    %1 = vector.load %arg2[%c0_1, %c0_2] : memref<128x128xf32, #tpu.memory_space<vmem>>, vector<128x128xf32>
    %cst = arith.constant dense<0.000000e+00> : vector<64x128xf32>
    %2 = tpu.matmul %0, %1, %cst {dimension_numbers = #tpu.dot_dimension_numbers<[1], [0], [0], [1], [0, 0, 1, 1], [], []>} : vector<64x128xf32>, vector<128x128xf32>, vector<64x128xf32> -> vector<64x128xf32>
    %c0_3 = arith.constant 0 : index
    %c0_4 = arith.constant 0 : index
    %3 = vector.load %arg3[%c0_3, %c0_4] : memref<1x128xf32, #tpu.memory_space<vmem>>, vector<1x128xf32>
    %4 = vector.broadcast %3 : vector<1x128xf32> to vector<64x128xf32>
    %5 = arith.addf %2, %4 : vector<64x128xf32>
    %cst_5 = arith.constant 0.000000e+00 : f32
    %6 = vector.broadcast %cst_5 : f32 to vector<64x128xf32>
    %7 = arith.maximumf %5, %6 : vector<64x128xf32>
    %c0_6 = arith.constant 0 : index
    %c0_7 = arith.constant 0 : index
    %8 = vector.load %arg4[%c0_6, %c0_7] : memref<64x128xf32, #tpu.memory_space<vmem>>, vector<64x128xf32>
    tpu.vector_store %arg4[%c0_6, %c0_7], %7 {strides = array<i32>} : memref<64x128xf32, #tpu.memory_space<vmem>>, vector<64x128xf32>,
    return
  }
  func.func @transform_0(%arg0: i32) -> (i32, i32) {
    %c0_i32 = arith.constant 0 : i32
    %c0_i32_0 = arith.constant 0 : i32
    return %arg0, %c0_i32 : i32, i32
  }
  func.func @transform_1(%arg0: i32) -> (i32, i32) {
    %c0_i32 = arith.constant 0 : i32
    %c0_i32_0 = arith.constant 0 : i32
    %c0_i32_1 = arith.constant 0 : i32
    return %c0_i32, %c0_i32_0 : i32, i32
  }
  func.func @transform_2(%arg0: i32) -> (i32, i32) {
    %c0_i32 = arith.constant 0 : i32
    %c0_i32_0 = arith.constant 0 : i32
    %c0_i32_1 = arith.constant 0 : i32
    return %c0_i32, %c0_i32_0 : i32, i32
  }
  func.func @transform_3(%arg0: i32) -> (i32, i32) {
    %c0_i32 = arith.constant 0 : i32
    %c0_i32_0 = arith.constant 0 : i32
    return %arg0, %c0_i32 : i32, i32
  }
}

</mosaic_0001>

<llo_original>
// kernel: tpu_custom_call.1
$region0: #{tpu_custom_call.1}
  #allocation0 [shape = 'u32[]', space=smem, size = 0x4, offset = 0x4, fixed_abs, tag = 'smem constant byte address 0x4 - core index']
  #allocation1 [shape = 'u32[144,128]{1,0:T(1,128)}', space=vmem, size = 0x12000, scoped, tag = 'internal scratch']
  %s0 = inlined_call_operand.hbm [shape: f32[64,128], index: 0, kind: input, shape index: {}]
  %s1 = inlined_call_operand.hbm [shape: f32[128,128], index: 1, kind: input, shape index: {}]
  %s2 = inlined_call_operand.vmem [shape: f32[1,128], index: 2, kind: input, shape index: {}]
  %s3 = inlined_call_operand.hbm [shape: f32[64,128], index: 3, kind: output, shape index: {}]
  %s4 = sld [smem:[#allocation0]]
  $region30: #{tpu_custom_call.1} parent=0
    _
  %s6 = ssub.s32 1, %s4
  %s7 = scalar_select 0, %s6, %s4
  $region1: #{tpu_custom_call.1} parent=0
    #allocation2 [shape = 'u8[32768]{0}', space=vmem, size = 0x8000, scoped, tag = 'input window, operand 0, single buffered']
    #allocation3 [shape = 's32[1]{0}', space=sflag, size = 0x4, scoped, tag = 'scoped memory for tpu_custom_call.1']
    #allocation4 [shape = 's32[1]{0}', space=sflag, size = 0x4, scoped, tag = 'scoped memory for tpu_custom_call.1']
    #allocation5 [shape = 'u8[65536]{0}', space=vmem, size = 0x10000, scoped, tag = 'input window, operand 1, single buffered']
    #allocation6 [shape = 's32[1]{0}', space=sflag, size = 0x4, scoped, tag = 'scoped memory for tpu_custom_call.1']
    #allocation7 [shape = 'u8[32768]{0}', space=vmem, size = 0x8000, scoped, tag = 'output window, operand 0, single buffered']
    %8 = vsyncpa [#allocation3], 0
    %9 = vsyncpa [#allocation6], 0
    %10 = vsyncpa [#allocation4], 0
    // Predicated region
    $region2: #{tpu_custom_call.1} parent=1 // pred_check
      _
    $region3: #{tpu_custom_call.1} parent=1 // pred_check_branch
      %12 = sbr.rel (0) target = $region5
    $region4: #{tpu_custom_call.1} parent=1 // pred_region
      %s14 = ssub.s32 1024, 1024
      %15 = vsyncadd [#allocation3], %s14
      %s16 = sshll.u32 [#allocation2], 4
      %s17 = int_to_ptr.vmem [resolvable:$true] %s16
      %22 = dma.hbm_to_vmem [thread:$0]  %s0, 1024, %s17, [#allocation3], 128, 128, 8
    $region5: #{tpu_custom_call.1} parent=1 // pred_fallthru
      _
    // Predicated region
    $region6: #{tpu_custom_call.1} parent=1 // pred_check
      _
    $region7: #{tpu_custom_call.1} parent=1 // pred_check_branch
      %24 = sbr.rel (0) target = $region9
    $region8: #{tpu_custom_call.1} parent=1 // pred_region
      %s26 = ssub.s32 2048, 2048
      %27 = vsyncadd [#allocation6], %s26
      %s28 = sshll.u32 [#allocation5], 4
      %s29 = int_to_ptr.vmem [resolvable:$true] %s28
      %34 = dma.hbm_to_vmem [thread:$0]  %s1, 2048, %s29, [#allocation6], 128, 128, 8
    $region9: #{tpu_custom_call.1} parent=1 // pred_fallthru
      _
    // Predicated region
    $region10: #{tpu_custom_call.1} parent=1 // pred_check
      _
    $region11: #{tpu_custom_call.1} parent=1 // pred_check_branch
      %36 = sbr.rel (0) target = $region13
    $region12: #{tpu_custom_call.1} parent=1 // pred_region
      _
    $region13: #{tpu_custom_call.1} parent=1 // pred_fallthru
      _
    // Predicated region
    $region14: #{tpu_custom_call.1} parent=1 // pred_check
      _
    $region15: #{tpu_custom_call.1} parent=1 // pred_check_branch
      %38 = sbr.rel (0) target = $region17
    $region16: #{tpu_custom_call.1} parent=1 // pred_region
      %39 = dma.done [#allocation3], 1024
    $region17: #{tpu_custom_call.1} parent=1 // pred_fallthru
      _
    // Predicated region
    $region18: #{tpu_custom_call.1} parent=1 // pred_check
      _
    $region19: #{tpu_custom_call.1} parent=1 // pred_check_branch
      %41 = sbr.rel (0) target = $region21
    $region20: #{tpu_custom_call.1} parent=1 // pred_region
      %42 = dma.done [#allocation6], 2048
    $region21: #{tpu_custom_call.1} parent=1 // pred_fallthru
      _
    %v43 = vld [vmem:[#allocation2] sm:$0xff]
    %v44 = vld [vmem:[#allocation2 + $0x8] sm:$0xff]
    %v45 = vld [vmem:[#allocation2 + $0x10] sm:$0xff]
    %v46 = vld [vmem:[#allocation2 + $0x18] sm:$0xff]
    %v47 = vld [vmem:[#allocation2 + $0x20] sm:$0xff]
    %v48 = vld [vmem:[#allocation2 + $0x28] sm:$0xff]
    %v49 = vld [vmem:[#allocation2 + $0x30] sm:$0xff]
    %v50 = vld [vmem:[#allocation2 + $0x38] sm:$0xff]
    %v51 = vld [vmem:[#allocation5] sm:$0xff]
    %v52 = vld [vmem:[#allocation5 + $0x8] sm:$0xff]
    %v53 = vld [vmem:[#allocation5 + $0x10] sm:$0xff]
    %v54 = vld [vmem:[#allocation5 + $0x18] sm:$0xff]
    %v55 = vld [vmem:[#allocation5 + $0x20] sm:$0xff]
    %v56 = vld [vmem:[#allocation5 + $0x28] sm:$0xff]
    %v57 = vld [vmem:[#allocation5 + $0x30] sm:$0xff]
    %v58 = vld [vmem:[#allocation5 + $0x38] sm:$0xff]
    %v59 = vld [vmem:[#allocation5 + $0x40] sm:$0xff]
    %v60 = vld [vmem:[#allocation5 + $0x48] sm:$0xff]
    %v61 = vld [vmem:[#allocation5 + $0x50] sm:$0xff]
    %v62 = vld [vmem:[#allocation5 + $0x58] sm:$0xff]
    %v63 = vld [vmem:[#allocation5 + $0x60] sm:$0xff]
    %v64 = vld [vmem:[#allocation5 + $0x68] sm:$0xff]
    %v65 = vld [vmem:[#allocation5 + $0x70] sm:$0xff]
    %v66 = vld [vmem:[#allocation5 + $0x78] sm:$0xff]
    %v67 = vld [vmem:[%s2] sm:$0x1]
    %v69 = vlaneseq
    %v70 = vshrl.u32 %v69, 7
    %v71 = vsub.s32 0, %v70
    %v72 = vrot.slane %v67, %v71
    %74 = vmatprep.subr.mxu0 0.0
    %75 = vmatpush1.msra.mxu0 %v51
    %76 = vmatprep.subr.mxu0 0.0
    %77 = vmatpush1.msra.mxu0 %v52
    %78 = vmatprep.subr.mxu0 0.0
    %79 = vmatpush1.msra.mxu0 %v53
    %80 = vmatprep.subr.mxu0 0.0
    %81 = vmatpush1.msra.mxu0 %v54
    %82 = vmatprep.subr.mxu0 0.0
    %83 = vmatpush1.msra.mxu0 %v55
    %84 = vmatprep.subr.mxu0 0.0
    %85 = vmatpush1.msra.mxu0 %v56
    %86 = vmatprep.subr.mxu0 0.0
    %87 = vmatpush1.msra.mxu0 %v57
    %88 = vmatprep.subr.mxu0 0.0
    %89 = vmatpush1.msra.mxu0 %v58
    %90 = vmatprep.subr.mxu0 0.0
    %91 = vmatpush1.msra.mxu0 %v59
    %92 = vmatprep.subr.mxu0 0.0
    %93 = vmatpush1.msra.mxu0 %v60
    %94 = vmatprep.subr.mxu0 0.0
    %95 = vmatpush1.msra.mxu0 %v61
    %96 = vmatprep.subr.mxu0 0.0
    %97 = vmatpush1.msra.mxu0 %v62
    %98 = vmatprep.subr.mxu0 0.0
    %99 = vmatpush1.msra.mxu0 %v63
    %100 = vmatprep.subr.mxu0 0.0
    %101 = vmatpush1.msra.mxu0 %v64
    %102 = vmatprep.subr.mxu0 0.0
    %103 = vmatpush1.msra.mxu0 %v65
    %104 = vmatprep.subr.mxu0 0.0
    %105 = vmatpush1.msra.mxu0 %v66
    %106 = vmatprep.subr.mxu0 0.0
    %107 = vmatpush1.msra.mxu0 0.0
    %108 = vmatprep.subr.mxu0 0.0
    %109 = vmatpush1.msra.mxu0 0.0
    %110 = vmatprep.subr.mxu0 0.0
    %111 = vmatpush1.msra.mxu0 0.0
    %112 = vmatprep.subr.mxu0 0.0
    %113 = vmatpush1.msra.mxu0 0.0
    %114 = vmatprep.subr.mxu0 0.0
    %115 = vmatpush1.msra.mxu0 0.0
    %116 = vmatprep.subr.mxu0 0.0
    %117 = vmatpush1.msra.mxu0 0.0
    %118 = vmatprep.subr.mxu0 0.0
    %119 = vmatpush1.msra.mxu0 0.0
    %120 = vmatprep.subr.mxu0 0.0
    %121 = vmatpush1.msra.mxu0 0.0
    %122 = vmatprep.subr.mxu0 0.0
    %123 = vmatpush1.msra.mxu0 0.0
    %124 = vmatprep.subr.mxu0 0.0
    %125 = vmatpush1.msra.mxu0 0.0
    %126 = vmatprep.subr.mxu0 0.0
    %127 = vmatpush1.msra.mxu0 0.0
    %128 = vmatprep.subr.mxu0 0.0
    %129 = vmatpush1.msra.mxu0 0.0
    %130 = vmatprep.subr.mxu0 0.0
    %131 = vmatpush1.msra.mxu0 0.0
    %132 = vmatprep.subr.mxu0 0.0
    %133 = vmatpush1.msra.mxu0 0.0
    %134 = vmatprep.subr.mxu0 0.0
    %135 = vmatpush1.msra.mxu0 0.0
    %136 = vmatprep.subr.mxu0 0.0
    %137 = vmatpush1.msra.mxu0 0.0
    %138 = vmatprep.mubr.f32.mxu0 0.0
    %139 = vmatmul.mubr.f32.gmra.mrb[0].mxu0 %v43
    %v140 = vpop.f32.mrb[0].mxu0
    %v141 = vadd.f32 %v72, %v140
    %v142 = vpop.f32.mrb[0].mxu0
    %143 = vmatprep.mubr.f32.mxu0 0.0
    %144 = vmatmul.mubr.f32.gmra.mrb[0].mxu0 %v44
    %v145 = vpop.f32.mrb[0].mxu0
    %v146 = vadd.f32 %v72, %v145
    %v147 = vpop.f32.mrb[0].mxu0
    %148 = vmatprep.mubr.f32.mxu0 0.0
    %149 = vmatmul.mubr.f32.gmra.mrb[0].mxu0 %v45
    %v150 = vpop.f32.mrb[0].mxu0
    %v151 = vadd.f32 %v72, %v150
    %v152 = vpop.f32.mrb[0].mxu0
    %153 = vmatprep.mubr.f32.mxu0 0.0
    %154 = vmatmul.mubr.f32.gmra.mrb[0].mxu0 %v46
    %v155 = vpop.f32.mrb[0].mxu0
    %v156 = vadd.f32 %v72, %v155
    %v157 = vpop.f32.mrb[0].mxu0
    %158 = vmatprep.mubr.f32.mxu0 0.0
    %159 = vmatmul.mubr.f32.gmra.mrb[0].mxu0 %v47
    %v160 = vpop.f32.mrb[0].mxu0
    %v161 = vadd.f32 %v72, %v160
    %v162 = vpop.f32.mrb[0].mxu0
    %163 = vmatprep.mubr.f32.mxu0 0.0
    %164 = vmatmul.mubr.f32.gmra.mrb[0].mxu0 %v48
    %v165 = vpop.f32.mrb[0].mxu0
    %v166 = vadd.f32 %v72, %v165
    %v167 = vpop.f32.mrb[0].mxu0
    %168 = vmatprep.mubr.f32.mxu0 0.0
    %169 = vmatmul.mubr.f32.gmra.mrb[0].mxu0 %v49
    %v170 = vpop.f32.mrb[0].mxu0
    %v171 = vadd.f32 %v72, %v170
    %v172 = vpop.f32.mrb[0].mxu0
    %173 = vmatprep.mubr.f32.mxu0 0.0
    %174 = vmatmul.mubr.f32.gmra.mrb[0].mxu0 %v50
    %v175 = vpop.f32.mrb[0].mxu0
    %v176 = vadd.f32 %v72, %v175
    %v177 = vpop.f32.mrb[0].mxu0
    %178 = vdwg.mxu0
    %v179 = vmax.f32 %v141, 0.0
    %v180 = vmax.f32 %v146, 0.0
    %v181 = vmax.f32 %v151, 0.0
    %v182 = vmax.f32 %v156, 0.0
    %v183 = vmax.f32 %v161, 0.0
    %v184 = vmax.f32 %v166, 0.0
    %v185 = vmax.f32 %v171, 0.0
    %v186 = vmax.f32 %v176, 0.0
    %187 = vst [vmem:[#allocation7] sm:$0xff] %v179
    %188 = vst [vmem:[#allocation7 + $0x8] sm:$0xff] %v180
    %189 = vst [vmem:[#allocation7 + $0x10] sm:$0xff] %v181
    %190 = vst [vmem:[#allocation7 + $0x18] sm:$0xff] %v182
    %191 = vst [vmem:[#allocation7 + $0x20] sm:$0xff] %v183
    %192 = vst [vmem:[#allocation7 + $0x28] sm:$0xff] %v184
    %193 = vst [vmem:[#allocation7 + $0x30] sm:$0xff] %v185
    %194 = vst [vmem:[#allocation7 + $0x38] sm:$0xff] %v186
    // Predicated region
    $region22: #{tpu_custom_call.1} parent=1 // pred_check
      _
    $region23: #{tpu_custom_call.1} parent=1 // pred_check_branch
      %196 = sbr.rel (0) target = $region25
    $region24: #{tpu_custom_call.1} parent=1 // pred_region
      %s198 = ssub.s32 1024, 1024
      %199 = vsyncadd [#allocation4], %s198
      %s200 = sshll.u32 [#allocation7], 4
      %s201 = int_to_ptr.vmem [resolvable:$true] %s200
      %206 = dma.vmem_to_hbm [thread:$0]  %s201, 1024, %s3, [#allocation4], 128, 128, 8
    $region25: #{tpu_custom_call.1} parent=1 // pred_fallthru
      _
    // Predicated region
    $region26: #{tpu_custom_call.1} parent=1 // pred_check
      _
    $region27: #{tpu_custom_call.1} parent=1 // pred_check_branch
      %208 = sbr.rel (0) target = $region29
    $region28: #{tpu_custom_call.1} parent=1 // pred_region
      %209 = dma.done [#allocation4], 1024
    $region29: #{tpu_custom_call.1} parent=1 // pred_fallthru
      _
    %210 = vsyncpa [#allocation3], 1
    %211 = vsyncpa [#allocation6], 1
    %212 = vsyncpa [#allocation4], 1

// kernel: tpu_custom_call.1
$region0: #{tpu_custom_call.1}
  #allocation0 [shape = 'u32[]', space=smem, size = 0x4, offset = 0x4, fixed_abs, tag = 'smem constant byte address 0x4 - core index']
  #allocation1 [shape = 'u32[144,128]{1,0:T(1,128)}', space=vmem, size = 0x12000, scoped, tag = 'internal scratch']
  %s0 = inlined_call_operand.hbm [shape: f32[64,128], index: 0, kind: input, shape index: {}]
  %s1 = inlined_call_operand.hbm [shape: f32[128,128], index: 1, kind: input, shape index: {}]
  %s2 = inlined_call_operand.vmem [shape: f32[1,128], index: 2, kind: input, shape index: {}]
  %s3 = inlined_call_operand.hbm [shape: f32[64,128], index: 3, kind: output, shape index: {}]
  %s4 = sld [smem:[#allocation0]]
  $region30: #{tpu_custom_call.1} parent=0
    _
  %s6 = ssub.s32 1, %s4
  %s7 = scalar_select 0, %s6, %s4
  $region1: #{tpu_custom_call.1} parent=0
    #allocation2 [shape = 'u8[32768]{0}', space=vmem, size = 0x8000, scoped, tag = 'input window, operand 0, single buffered']
    #allocation3 [shape = 's32[1]{0}', space=sflag, size = 0x4, scoped, tag = 'scoped memory for tpu_custom_call.1']
    #allocation4 [shape = 's32[1]{0}', space=sflag, size = 0x4, scoped, tag = 'scoped memory for tpu_custom_call.1']
    #allocation5 [shape = 'u8[65536]{0}', space=vmem, size = 0x10000, scoped, tag = 'input window, operand 1, single buffered']
    #allocation6 [shape = 's32[1]{0}', space=sflag, size = 0x4, scoped, tag = 'scoped memory for tpu_custom_call.1']
    #allocation7 [shape = 'u8[32768]{0}', space=vmem, size = 0x8000, scoped, tag = 'output window, operand 0, single buffered']
    %8 = vsyncpa [#allocation3], 0
    %9 = vsyncpa [#allocation6], 0
    %10 = vsyncpa [#allocation4], 0
    // Predicated region
    $region2: #{tpu_custom_call.1} parent=1 // pred_check
      _
    $region3: #{tpu_custom_call.1} parent=1 // pred_check_branch
      %12 = sbr.rel (0) target = $region5
    $region4: #{tpu_custom_call.1} parent=1 // pred_region
      %s14 = ssub.s32 1024, 1024
      %15 = vsyncadd [#allocation3], %s14
      %s16 = sshll.u32 [#allocation2], 4
      %s17 = int_to_ptr.vmem [resolvable:$true] %s16
      %22 = dma.hbm_to_vmem [thread:$0]  %s0, 1024, %s17, [#allocation3], 128, 128, 8
    $region5: #{tpu_custom_call.1} parent=1 // pred_fallthru
      _
    // Predicated region
    $region6: #{tpu_custom_call.1} parent=1 // pred_check
      _
    $region7: #{tpu_custom_call.1} parent=1 // pred_check_branch
      %24 = sbr.rel (0) target = $region9
    $region8: #{tpu_custom_call.1} parent=1 // pred_region
      %s26 = ssub.s32 2048, 2048
      %27 = vsyncadd [#allocation6], %s26
      %s28 = sshll.u32 [#allocation5], 4
      %s29 = int_to_ptr.vmem [resolvable:$true] %s28
      %34 = dma.hbm_to_vmem [thread:$0]  %s1, 2048, %s29, [#allocation6], 128, 128, 8
    $region9: #{tpu_custom_call.1} parent=1 // pred_fallthru
      _
    // Predicated region
    $region10: #{tpu_custom_call.1} parent=1 // pred_check
      _
    $region11: #{tpu_custom_call.1} parent=1 // pred_check_branch
      %36 = sbr.rel (0) target = $region13
    $region12: #{tpu_custom_call.1} parent=1 // pred_region
      _
    $region13: #{tpu_custom_call.1} parent=1 // pred_fallthru
      _
    // Predicated region
    $region14: #{tpu_custom_call.1} parent=1 // pred_check
      _
    $region15: #{tpu_custom_call.1} parent=1 // pred_check_branch
      %38 = sbr.rel (0) target = $region17
    $region16: #{tpu_custom_call.1} parent=1 // pred_region
      %39 = dma.done [#allocation3], 1024
    $region17: #{tpu_custom_call.1} parent=1 // pred_fallthru
      _
    // Predicated region
    $region18: #{tpu_custom_call.1} parent=1 // pred_check
      _
    $region19: #{tpu_custom_call.1} parent=1 // pred_check_branch
      %41 = sbr.rel (0) target = $region21
    $region20: #{tpu_custom_call.1} parent=1 // pred_region
      %42 = dma.done [#allocation6], 2048
    $region21: #{tpu_custom_call.1} parent=1 // pred_fallthru
      _
    %v43 = vld [vmem:[#allocation2] sm:$0xff]
    %v44 = vld [vmem:[#allocation2 + $0x8] sm:$0xff]
    %v45 = vld [vmem:[#allocation2 + $0x10] sm:$0xff]
    %v46 = vld [vmem:[#allocation2 + $0x18] sm:$0xff]
    %v47 = vld [vmem:[#allocation2 + $0x20] sm:$0xff]
    %v48 = vld [vmem:[#allocation2 + $0x28] sm:$0xff]
    %v49 = vld [vmem:[#allocation2 + $0x30] sm:$0xff]
    %v50 = vld [vmem:[#allocation2 + $0x38] sm:$0xff]
    %v51 = vld [vmem:[#allocation5] sm:$0xff]
    %v52 = vld [vmem:[#allocation5 + $0x8] sm:$0xff]
    %v53 = vld [vmem:[#allocation5 + $0x10] sm:$0xff]
    %v54 = vld [vmem:[#allocation5 + $0x18] sm:$0xff]
    %v55 = vld [vmem:[#allocation5 + $0x20] sm:$0xff]
    %v56 = vld [vmem:[#allocation5 + $0x28] sm:$0xff]
    %v57 = vld [vmem:[#allocation5 + $0x30] sm:$0xff]
    %v58 = vld [vmem:[#allocation5 + $0x38] sm:$0xff]
    %v59 = vld [vmem:[#allocation5 + $0x40] sm:$0xff]
    %v60 = vld [vmem:[#allocation5 + $0x48] sm:$0xff]
    %v61 = vld [vmem:[#allocation5 + $0x50] sm:$0xff]
    %v62 = vld [vmem:[#allocation5 + $0x58] sm:$0xff]
    %v63 = vld [vmem:[#allocation5 + $0x60] sm:$0xff]
    %v64 = vld [vmem:[#allocation5 + $0x68] sm:$0xff]
    %v65 = vld [vmem:[#allocation5 + $0x70] sm:$0xff]
    %v66 = vld [vmem:[#allocation5 + $0x78] sm:$0xff]
    %v67 = vld [vmem:[%s2] sm:$0x1]
    %v69 = vlaneseq
    %v70 = vshrl.u32 %v69, 7
    %v71 = vsub.s32 0, %v70
    %v72 = vrot.slane %v67, %v71
    %74 = vmatprep.subr.mxu0 0.0
    %75 = vmatpush1.msra.mxu0 %v51
    %76 = vmatprep.subr.mxu0 0.0
    %77 = vmatpush1.msra.mxu0 %v52
    %78 = vmatprep.subr.mxu0 0.0
    %79 = vmatpush1.msra.mxu0 %v53
    %80 = vmatprep.subr.mxu0 0.0
    %81 = vmatpush1.msra.mxu0 %v54
    %82 = vmatprep.subr.mxu0 0.0
    %83 = vmatpush1.msra.mxu0 %v55
    %84 = vmatprep.subr.mxu0 0.0
    %85 = vmatpush1.msra.mxu0 %v56
    %86 = vmatprep.subr.mxu0 0.0
    %87 = vmatpush1.msra.mxu0 %v57
    %88 = vmatprep.subr.mxu0 0.0
    %89 = vmatpush1.msra.mxu0 %v58
    %90 = vmatprep.subr.mxu0 0.0
    %91 = vmatpush1.msra.mxu0 %v59
    %92 = vmatprep.subr.mxu0 0.0
    %93 = vmatpush1.msra.mxu0 %v60
    %94 = vmatprep.subr.mxu0 0.0
    %95 = vmatpush1.msra.mxu0 %v61
    %96 = vmatprep.subr.mxu0 0.0
    %97 = vmatpush1.msra.mxu0 %v62
    %98 = vmatprep.subr.mxu0 0.0
    %99 = vmatpush1.msra.mxu0 %v63
    %100 = vmatprep.subr.mxu0 0.0
    %101 = vmatpush1.msra.mxu0 %v64
    %102 = vmatprep.subr.mxu0 0.0
    %103 = vmatpush1.msra.mxu0 %v65
    %104 = vmatprep.subr.mxu0 0.0
    %105 = vmatpush1.msra.mxu0 %v66
    %106 = vmatprep.subr.mxu0 0.0
    %107 = vmatpush1.msra.mxu0 0.0
    %108 = vmatprep.subr.mxu0 0.0
    %109 = vmatpush1.msra.mxu0 0.0
    %110 = vmatprep.subr.mxu0 0.0
    %111 = vmatpush1.msra.mxu0 0.0
    %112 = vmatprep.subr.mxu0 0.0
    %113 = vmatpush1.msra.mxu0 0.0
    %114 = vmatprep.subr.mxu0 0.0
    %115 = vmatpush1.msra.mxu0 0.0
    %116 = vmatprep.subr.mxu0 0.0
    %117 = vmatpush1.msra.mxu0 0.0
    %118 = vmatprep.subr.mxu0 0.0
    %119 = vmatpush1.msra.mxu0 0.0
    %120 = vmatprep.subr.mxu0 0.0
    %121 = vmatpush1.msra.mxu0 0.0
    %122 = vmatprep.subr.mxu0 0.0
    %123 = vmatpush1.msra.mxu0 0.0
    %124 = vmatprep.subr.mxu0 0.0
    %125 = vmatpush1.msra.mxu0 0.0
    %126 = vmatprep.subr.mxu0 0.0
    %127 = vmatpush1.msra.mxu0 0.0
    %128 = vmatprep.subr.mxu0 0.0
    %129 = vmatpush1.msra.mxu0 0.0
    %130 = vmatprep.subr.mxu0 0.0
    %131 = vmatpush1.msra.mxu0 0.0
    %132 = vmatprep.subr.mxu0 0.0
    %133 = vmatpush1.msra.mxu0 0.0
    %134 = vmatprep.subr.mxu0 0.0
    %135 = vmatpush1.msra.mxu0 0.0
    %136 = vmatprep.subr.mxu0 0.0
    %137 = vmatpush1.msra.mxu0 0.0
    %138 = vmatprep.mubr.f32.mxu0 0.0
    %139 = vmatmul.mubr.f32.gmra.mrb[0].mxu0 %v43
    %v140 = vpop.f32.mrb[0].mxu0
    %v141 = vadd.f32 %v72, %v140
    %v142 = vpop.f32.mrb[0].mxu0
    %143 = vmatprep.mubr.f32.mxu0 0.0
    %144 = vmatmul.mubr.f32.gmra.mrb[0].mxu0 %v44
    %v145 = vpop.f32.mrb[0].mxu0
    %v146 = vadd.f32 %v72, %v145
    %v147 = vpop.f32.mrb[0].mxu0
    %148 = vmatprep.mubr.f32.mxu0 0.0
    %149 = vmatmul.mubr.f32.gmra.mrb[0].mxu0 %v45
    %v150 = vpop.f32.mrb[0].mxu0
    %v151 = vadd.f32 %v72, %v150
    %v152 = vpop.f32.mrb[0].mxu0
    %153 = vmatprep.mubr.f32.mxu0 0.0
    %154 = vmatmul.mubr.f32.gmra.mrb[0].mxu0 %v46
    %v155 = vpop.f32.mrb[0].mxu0
    %v156 = vadd.f32 %v72, %v155
    %v157 = vpop.f32.mrb[0].mxu0
    %158 = vmatprep.mubr.f32.mxu0 0.0
    %159 = vmatmul.mubr.f32.gmra.mrb[0].mxu0 %v47
    %v160 = vpop.f32.mrb[0].mxu0
    %v161 = vadd.f32 %v72, %v160
    %v162 = vpop.f32.mrb[0].mxu0
    %163 = vmatprep.mubr.f32.mxu0 0.0
    %164 = vmatmul.mubr.f32.gmra.mrb[0].mxu0 %v48
    %v165 = vpop.f32.mrb[0].mxu0
    %v166 = vadd.f32 %v72, %v165
    %v167 = vpop.f32.mrb[0].mxu0
    %168 = vmatprep.mubr.f32.mxu0 0.0
    %169 = vmatmul.mubr.f32.gmra.mrb[0].mxu0 %v49
    %v170 = vpop.f32.mrb[0].mxu0
    %v171 = vadd.f32 %v72, %v170
    %v172 = vpop.f32.mrb[0].mxu0
    %173 = vmatprep.mubr.f32.mxu0 0.0
    %174 = vmatmul.mubr.f32.gmra.mrb[0].mxu0 %v50
    %v175 = vpop.f32.mrb[0].mxu0
    %v176 = vadd.f32 %v72, %v175
    %v177 = vpop.f32.mrb[0].mxu0
    %178 = vdwg.mxu0
    %v179 = vmax.f32 %v141, 0.0
    %v180 = vmax.f32 %v146, 0.0
    %v181 = vmax.f32 %v151, 0.0
    %v182 = vmax.f32 %v156, 0.0
    %v183 = vmax.f32 %v161, 0.0
    %v184 = vmax.f32 %v166, 0.0
    %v185 = vmax.f32 %v171, 0.0
    %v186 = vmax.f32 %v176, 0.0
    %187 = vst [vmem:[#allocation7] sm:$0xff] %v179
    %188 = vst [vmem:[#allocation7 + $0x8] sm:$0xff] %v180
    %189 = vst [vmem:[#allocation7 + $0x10] sm:$0xff] %v181
    %190 = vst [vmem:[#allocation7 + $0x18] sm:$0xff] %v182
    %191 = vst [vmem:[#allocation7 + $0x20] sm:$0xff] %v183
    %192 = vst [vmem:[#allocation7 + $0x28] sm:$0xff] %v184
    %193 = vst [vmem:[#allocation7 + $0x30] sm:$0xff] %v185
    %194 = vst [vmem:[#allocation7 + $0x38] sm:$0xff] %v186
    // Predicated region
    $region22: #{tpu_custom_call.1} parent=1 // pred_check
      _
    $region23: #{tpu_custom_call.1} parent=1 // pred_check_branch
      %196 = sbr.rel (0) target = $region25
    $region24: #{tpu_custom_call.1} parent=1 // pred_region
      %s198 = ssub.s32 1024, 1024
      %199 = vsyncadd [#allocation4], %s198
      %s200 = sshll.u32 [#allocation7], 4
      %s201 = int_to_ptr.vmem [resolvable:$true] %s200
      %206 = dma.vmem_to_hbm [thread:$0]  %s201, 1024, %s3, [#allocation4], 128, 128, 8
    $region25: #{tpu_custom_call.1} parent=1 // pred_fallthru
      _
    // Predicated region
    $region26: #{tpu_custom_call.1} parent=1 // pred_check
      _
    $region27: #{tpu_custom_call.1} parent=1 // pred_check_branch
      %208 = sbr.rel (0) target = $region29
    $region28: #{tpu_custom_call.1} parent=1 // pred_region
      %209 = dma.done [#allocation4], 1024
    $region29: #{tpu_custom_call.1} parent=1 // pred_fallthru
      _
    %210 = vsyncpa [#allocation3], 1
    %211 = vsyncpa [#allocation6], 1
    %212 = vsyncpa [#allocation4], 1

</llo_original>
